<compile_context>
chip_gen: v5e
topology: v5e:2x2
jax: 0.10.0
libtpu: 0.0.40
codegen_flags: <defaults>
</compile_context>

<pallas_src>
import functools

import jax
import jax.numpy as jnp
from jax.experimental import pallas as pl
from jax.experimental.pallas import tpu as pltpu


# ----------------------------------------------------------------------------
# Tiling plans
# ----------------------------------------------------------------------------
def _round_up(x, m):
    return ((x + m - 1) // m) * m


def _choose_tile(dim, candidates):
    for c in candidates:
        if dim % c == 0:
            return c
    return None


def _plan_m(m):
    # Tile size / padded size for the M (rows) axis.
    t = _choose_tile(m, (256, 128, 64, 32, 16))
    if t is not None:
        return t, m
    if m <= 256:
        return m, m                      # single full-M tile (full dim is always legal)
    mp = _round_up(m, 256)
    return 256, mp


def _plan_k(k):
    t = _choose_tile(k, (512, 384, 256, 128))
    if t is not None:
        return t, k
    if k <= 1024:
        return k, k                      # single full-K tile (e.g. conv1 K=147, 3x3x64=576)
    kp = _round_up(k, 512)
    return 512, kp


def _plan_n(n):
    # tn=256 matches the v6e/v7x 256-wide MXU when Cout allows; small Cout (64) uses a
    # full-N tile (masked stores on those few early layers are accepted).
    t = _choose_tile(n, (256, 128))
    if t is not None:
        return t, n
    if n <= 512:
        return n, n
    return 128, _round_up(n, 128)


_VMEM_LIMIT = 48 * 1024 * 1024           # < v7x's 64 MiB physical VMEM, leaves headroom


# ----------------------------------------------------------------------------
# Fused matmul + bias (+ residual) (+ ReLU) kernel, bf16 operands, f32 accumulation
# ----------------------------------------------------------------------------
def _mm_kernel(*refs, relu, has_res):
    if has_res:
        a_ref, b_ref, bias_ref, res_ref, o_ref, acc_ref = refs
    else:
        a_ref, b_ref, bias_ref, o_ref, acc_ref = refs
        res_ref = None
    k = pl.program_id(2)

    @pl.when(k == 0)
    def _():
        acc_ref[...] = jnp.zeros_like(acc_ref)

    acc_ref[...] += jnp.dot(a_ref[...], b_ref[...], preferred_element_type=jnp.float32)

    @pl.when(k == pl.num_programs(2) - 1)
    def _():
        y = acc_ref[...] + bias_ref[...]
        if res_ref is not None:
            y = y + res_ref[...].astype(jnp.float32)
        if relu:
            y = jnp.maximum(y, 0.0)
        o_ref[...] = y.astype(o_ref.dtype)


@functools.lru_cache(maxsize=None)
def _mm_call(mp, kp, np_, tm, tk, tn, relu, has_res, out_dtype_name):
    in_specs = [
        pl.BlockSpec((tm, tk), lambda i, j, k: (i, k)),       # A  (bf16)
        pl.BlockSpec((tk, tn), lambda i, j, k: (k, j)),       # B  (bf16)
        pl.BlockSpec((1, tn), lambda i, j, k: (0, j)),        # bias (f32)
    ]
    if has_res:
        in_specs.append(pl.BlockSpec((tm, tn), lambda i, j, k: (i, j)))  # residual (bf16)
    return pl.pallas_call(
        functools.partial(_mm_kernel, relu=relu, has_res=has_res),
        out_shape=jax.ShapeDtypeStruct((mp, np_), jnp.dtype(out_dtype_name)),
        grid=(mp // tm, np_ // tn, kp // tk),
        in_specs=in_specs,
        out_specs=pl.BlockSpec((tm, tn), lambda i, j, k: (i, j)),
        scratch_shapes=[pltpu.VMEM((tm, tn), jnp.float32)],
        compiler_params=pltpu.CompilerParams(
            dimension_semantics=("parallel", "parallel", "arbitrary"),
            vmem_limit_bytes=_VMEM_LIMIT,
        ),
    )


def matmul_bias(a, b, bias, relu, residual=None, out_dtype=jnp.bfloat16):
    m, k = a.shape
    n = b.shape[1]
    tm, mp = _plan_m(m)
    tk, kp = _plan_k(k)
    tn, np_ = _plan_n(n)

    a = a.astype(jnp.bfloat16)
    b = b.astype(jnp.bfloat16)
    bias = bias.astype(jnp.float32)
    if mp != m or kp != k:
        a = jnp.pad(a, ((0, mp - m), (0, kp - k)))
    if kp != k or np_ != n:
        b = jnp.pad(b, ((0, kp - k), (0, np_ - n)))
    if np_ != n:
        bias = jnp.pad(bias, (0, np_ - n))

    args = [a, b, bias.reshape(1, np_)]
    if residual is not None:
        r = residual.astype(jnp.bfloat16)
        if mp != m or np_ != n:
            r = jnp.pad(r, ((0, mp - m), (0, np_ - n)))
        args.append(r)

    out = _mm_call(mp, kp, np_, tm, tk, tn, bool(relu), residual is not None,
                   jnp.dtype(out_dtype).name)(*args)
    if mp != m or np_ != n:
        out = out[:m, :n]
    return out


# ----------------------------------------------------------------------------
# Max-pool (9-way max over shifted windows) — tiled over M, no 9x stacked HBM tensor
# ----------------------------------------------------------------------------
def _max9_kernel(*refs):
    o_ref = refs[-1]
    m = refs[0][...]
    for r in refs[1:-1]:
        m = jnp.maximum(m, r[...])
    o_ref[...] = m


@functools.lru_cache(maxsize=None)
def _max9_call(m, c, tm, dtype_name):
    spec = lambda: pl.BlockSpec((tm, c), lambda i: (i, 0))
    return pl.pallas_call(
        _max9_kernel,
        out_shape=jax.ShapeDtypeStruct((m, c), jnp.dtype(dtype_name)),
        grid=(m // tm,),
        in_specs=[spec() for _ in range(9)],
        out_specs=spec(),
        compiler_params=pltpu.CompilerParams(
            dimension_semantics=("parallel",),
            vmem_limit_bytes=_VMEM_LIMIT,
        ),
    )


def maxpool_3x3_s2(x):
    n, h, w, c = x.shape
    ho = (h + 2 - 3) // 2 + 1
    wo = (w + 2 - 3) // 2 + 1
    xp = jnp.pad(x, ((0, 0), (1, 1), (1, 1), (0, 0)), constant_values=-jnp.inf)
    m = n * ho * wo
    wins = []
    for di in range(3):
        for dj in range(3):
            wins.append(xp[:, di:di + 2 * (ho - 1) + 1:2,
                            dj:dj + 2 * (wo - 1) + 1:2, :].reshape(m, c))
    tm = _choose_tile(m, (512, 256, 128, 64, 32, 16)) or m
    out = _max9_call(m, c, tm, x.dtype.name)(*wins)
    return out.reshape(n, ho, wo, c)


# ----------------------------------------------------------------------------
# Global average pool — tiled over channels, f32 accumulation
# ----------------------------------------------------------------------------
def _avgpool_kernel(x_ref, o_ref, *, inv_hw):
    x = x_ref[...].astype(jnp.float32)
    o_ref[...] = (jnp.sum(x, axis=1) * inv_hw).astype(o_ref.dtype)


@functools.lru_cache(maxsize=None)
def _avgpool_call(n, hw, c, tc, out_dtype_name):
    return pl.pallas_call(
        functools.partial(_avgpool_kernel, inv_hw=1.0 / hw),
        out_shape=jax.ShapeDtypeStruct((n, c), jnp.dtype(out_dtype_name)),
        grid=(c // tc,),
        in_specs=[pl.BlockSpec((n, hw, tc), lambda j: (0, 0, j))],
        out_specs=pl.BlockSpec((n, tc), lambda j: (0, j)),
        compiler_params=pltpu.CompilerParams(
            dimension_semantics=("parallel",),
            vmem_limit_bytes=_VMEM_LIMIT,
        ),
    )


def global_avgpool(x):
    # nn.AdaptiveAvgPool2d((1,1)) + Flatten -> [N, C]
    n, h, w, c = x.shape
    tc = _choose_tile(c, (512, 256, 128)) or c
    return _avgpool_call(n, h * w, c, tc, jnp.dtype(jnp.bfloat16).name)(
        x.reshape(n, h * w, c))


# ----------------------------------------------------------------------------
# JAX glue (layout only: im2col / window extraction / reshapes)
# ----------------------------------------------------------------------------
def _im2col(x, kh, kw, stride, pad):
    n, h, w, c = x.shape
    if kh == 1 and kw == 1 and pad == 0:
        xs = x[:, ::stride, ::stride, :] if stride > 1 else x
        ho, wo = xs.shape[1], xs.shape[2]
        return xs.reshape(n * ho * wo, c), ho, wo
    if pad:
        x = jnp.pad(x, ((0, 0), (pad, pad), (pad, pad), (0, 0)))
    ho = (h + 2 * pad - kh) // stride + 1
    wo = (w + 2 * pad - kw) // stride + 1
    cols = []
    for di in range(kh):
        for dj in range(kw):
            cols.append(x[:, di:di + stride * (ho - 1) + 1:stride,
                            dj:dj + stride * (wo - 1) + 1:stride, :])
    patches = jnp.stack(cols, axis=3)                 # [N, Ho, Wo, kh*kw, C]
    return patches.reshape(n * ho * wo, kh * kw * c), ho, wo


def conv_bn(x, p, stride, pad, relu=True, residual=None):
    n = x.shape[0]
    kh, kw, cout = p["kh"], p["kw"], p["cout"]
    a, ho, wo = _im2col(x, kh, kw, stride, pad)
    res2d = residual.reshape(n * ho * wo, cout) if residual is not None else None
    y = matmul_bias(a, p["w2d"], p["bias"], relu, residual=res2d)
    return y.reshape(n, ho, wo, cout)


def bottleneck(x, blk):
    s = blk["stride"]
    out = conv_bn(x, blk["conv1"], stride=1, pad=0, relu=True)
    out = conv_bn(out, blk["conv2"], stride=s, pad=1, relu=True)
    identity = (conv_bn(x, blk["downsample"], stride=s, pad=0, relu=False)
                if "downsample" in blk else x)
    # conv3 + BN + residual add + ReLU fused into one Pallas epilogue.
    return conv_bn(out, blk["conv3"], stride=1, pad=0, relu=True, residual=identity)


# ----------------------------------------------------------------------------
# Deterministic parameter initialization (synthetic weights, ResNet50 shapes)
# BN scale is pre-folded into the bf16 weight matrix; epilogue only adds bias.
# ----------------------------------------------------------------------------
class _KeyGen:
    def __init__(self, key):
        self._key = key

    def __call__(self):
        self._key, k = jax.random.split(self._key)
        return k


def _init_conv_bn(kg, kh, kw, cin, cout, eps=1e-5):
    fan_in = kh * kw * cin
    w = jax.random.normal(kg(), (kh, kw, cin, cout), jnp.float32) * jnp.sqrt(2.0 / fan_in)
    gamma = 1.0 + 0.1 * jax.random.normal(kg(), (cout,), jnp.float32)
    beta = 0.1 * jax.random.normal(kg(), (cout,), jnp.float32)
    mean = 0.1 * jax.random.normal(kg(), (cout,), jnp.float32)
    var = 0.9 + 0.2 * jax.random.uniform(kg(), (cout,), jnp.float32)
    scale = gamma * jax.lax.rsqrt(var + eps)
    bias = beta - mean * scale
    w2d = (w * scale[None, None, None, :]).reshape(kh * kw * cin, cout).astype(jnp.bfloat16)
    return {"w2d": w2d, "bias": bias, "kh": kh, "kw": kw, "cin": cin, "cout": cout}


def init_params(key, embedding_dim=128, eps=1e-5):
    kg = _KeyGen(key)
    params = {"conv1": _init_conv_bn(kg, 7, 7, 3, 64)}
    layers_cfg = [(64, 3, 1), (128, 4, 2), (256, 6, 2), (512, 3, 2)]
    expansion = 4
    inplanes = 64
    layers = []
    for planes, num_blocks, stride in layers_cfg:
        blocks = []
        for b in range(num_blocks):
            s = stride if b == 0 else 1
            blk = {
                "stride": s,
                "conv1": _init_conv_bn(kg, 1, 1, inplanes, planes),
                "conv2": _init_conv_bn(kg, 3, 3, planes, planes),
                "conv3": _init_conv_bn(kg, 1, 1, planes, planes * expansion),
            }
            if s != 1 or inplanes != planes * expansion:
                blk["downsample"] = _init_conv_bn(kg, 1, 1, inplanes, planes * expansion)
            blocks.append(blk)
            inplanes = planes * expansion
        layers.append(blocks)
    params["layers"] = layers

    # Embedding head: Linear(2048, embedding_dim) + BatchNorm1d + ReLU (BN folded).
    fc_w = jax.random.normal(kg(), (inplanes, embedding_dim), jnp.float32) / jnp.sqrt(float(inplanes))
    fc_b = 0.1 * jax.random.normal(kg(), (embedding_dim,), jnp.float32)
    gamma = 1.0 + 0.1 * jax.random.normal(kg(), (embedding_dim,), jnp.float32)
    beta = 0.1 * jax.random.normal(kg(), (embedding_dim,), jnp.float32)
    mean = 0.1 * jax.random.normal(kg(), (embedding_dim,), jnp.float32)
    var = 0.9 + 0.2 * jax.random.uniform(kg(), (embedding_dim,), jnp.float32)
    scale = gamma * jax.lax.rsqrt(var + eps)
    bias = beta + (fc_b - mean) * scale
    params["fc"] = {"w2d": (fc_w * scale[None, :]).astype(jnp.bfloat16), "bias": bias}
    return params


# ----------------------------------------------------------------------------
# Forward pass (mirrors EmbeddingNet.forward)
# ----------------------------------------------------------------------------
def embedding_net_forward(x_nchw, params):
    x = jnp.transpose(x_nchw, (0, 2, 3, 1)).astype(jnp.bfloat16)   # NCHW -> NHWC bf16
    x = conv_bn(x, params["conv1"], stride=2, pad=3, relu=True)    # conv1 + bn1 + relu
    x = maxpool_3x3_s2(x)                                          # maxpool
    for blocks in params["layers"]:                                # layer1..layer4
        for blk in blocks:
            x = bottleneck(x, blk)
    feat = global_avgpool(x)                                       # avgpool + flatten
    fc = params["fc"]
    emb = matmul_bias(feat, fc["w2d"], fc["bias"], relu=True,
                      out_dtype=jnp.float32)                       # Linear + BN1d + ReLU
    return emb


if __name__ == "__main__":
    key = jax.random.PRNGKey(0)
    pkey, xkey = jax.random.split(key)
    params = init_params(pkey, embedding_dim=128)
    # Small but valid input: 32x32 survives the 5 stride-2 stages of ResNet50.
    x = jax.random.normal(xkey, (2, 3, 32, 32), jnp.float32)
    out = embedding_net_forward(x, params)
    out = jax.block_until_ready(out)
    assert out.shape == (2, 128), out.shape
    assert bool(jnp.all(jnp.isfinite(out)))
    assert bool(jnp.all(out >= 0.0))          # final ReLU
    print("KERNEL_OK")
</pallas_src>

<mosaic_0001>
module attributes {stable_mosaic.version = 11 : i64} {
  func.func @_mm_kernel(%arg0: i32, %arg1: i32, %arg2: i32, %arg3: memref<256x147xbf16, #tpu.memory_space<vmem>>, %arg4: memref<147x64xbf16, #tpu.memory_space<vmem>>, %arg5: memref<1x64xf32, #tpu.memory_space<vmem>>, %arg6: memref<256x64xbf16, #tpu.memory_space<vmem>>, %arg7: memref<256x64xf32, #tpu.memory_space<vmem>>) attributes {dimension_semantics = [#tpu.dimension_semantics<parallel>, #tpu.dimension_semantics<parallel>, #tpu.dimension_semantics<arbitrary>], iteration_bounds = array<i64: 2, 1, 1>, scalar_prefetch = 0 : i64, scratch_operands = 1 : i64, tpu.core_type = #tpu.core_type<tc>, window_params = [{transform_indices = @transform_0, window_bounds = array<i64: 256, 147>}, {transform_indices = @transform_1, window_bounds = array<i64: 147, 64>}, {transform_indices = @transform_2, window_bounds = array<i64: 1, 64>}, {transform_indices = @transform_3, window_bounds = array<i64: 256, 64>}]} {
    %c0_i32 = arith.constant 0 : i32
    %0 = arith.cmpi eq, %arg2, %c0_i32 : i32
    %1 = arith.extui %0 : i1 to i32
    %c0_i32_0 = arith.constant 0 : i32
    %2 = arith.cmpi ne, %1, %c0_i32_0 : i32
    scf.if %2 {
      %cst_10 = arith.constant 0.000000e+00 : f32
      %12 = vector.broadcast %cst_10 : f32 to vector<256x64xf32>
      %c0_11 = arith.constant 0 : index
      %c0_12 = arith.constant 0 : index
      %13 = vector.load %arg7[%c0_11, %c0_12] : memref<256x64xf32, #tpu.memory_space<vmem>>, vector<256x64xf32>
      tpu.vector_store %arg7[%c0_11, %c0_12], %12 {strides = array<i32>} : memref<256x64xf32, #tpu.memory_space<vmem>>, vector<256x64xf32>,
    } else {
    }
    %c0 = arith.constant 0 : index
    %c0_1 = arith.constant 0 : index
    %3 = vector.load %arg7[%c0, %c0_1] : memref<256x64xf32, #tpu.memory_space<vmem>>, vector<256x64xf32>
    %c0_2 = arith.constant 0 : index
    %c0_3 = arith.constant 0 : index
    %4 = vector.load %arg3[%c0_2, %c0_3] : memref<256x147xbf16, #tpu.memory_space<vmem>>, vector<256x147xbf16>
    %c0_4 = arith.constant 0 : index
    %c0_5 = arith.constant 0 : index
    %5 = vector.load %arg4[%c0_4, %c0_5] : memref<147x64xbf16, #tpu.memory_space<vmem>>, vector<147x64xbf16>
    %cst = arith.constant dense<0.000000e+00> : vector<256x64xf32>
    %6 = tpu.matmul %4, %5, %cst {dimension_numbers = #tpu.dot_dimension_numbers<[1], [0], [0], [1], [0, 0, 1, 1], [], []>} : vector<256x147xbf16>, vector<147x64xbf16>, vector<256x64xf32> -> vector<256x64xf32>
    %7 = arith.addf %3, %6 : vector<256x64xf32>
    %c0_6 = arith.constant 0 : index
    %c0_7 = arith.constant 0 : index
    %8 = vector.load %arg7[%c0_6, %c0_7] : memref<256x64xf32, #tpu.memory_space<vmem>>, vector<256x64xf32>
    tpu.vector_store %arg7[%c0_6, %c0_7], %7 {strides = array<i32>} : memref<256x64xf32, #tpu.memory_space<vmem>>, vector<256x64xf32>,
    %c0_i32_8 = arith.constant 0 : i32
    %9 = arith.cmpi eq, %arg2, %c0_i32_8 : i32
    %10 = arith.extui %9 : i1 to i32
    %c0_i32_9 = arith.constant 0 : i32
    %11 = arith.cmpi ne, %10, %c0_i32_9 : i32
    scf.if %11 {
      %c0_10 = arith.constant 0 : index
      %c0_11 = arith.constant 0 : index
      %12 = vector.load %arg7[%c0_10, %c0_11] : memref<256x64xf32, #tpu.memory_space<vmem>>, vector<256x64xf32>
      %c0_12 = arith.constant 0 : index
      %c0_13 = arith.constant 0 : index
      %13 = vector.load %arg5[%c0_12, %c0_13] : memref<1x64xf32, #tpu.memory_space<vmem>>, vector<1x64xf32>
      %14 = vector.broadcast %13 : vector<1x64xf32> to vector<256x64xf32>
      %15 = arith.addf %12, %14 : vector<256x64xf32>
      %cst_14 = arith.constant 0.000000e+00 : f32
      %16 = vector.broadcast %cst_14 : f32 to vector<256x64xf32>
      %17 = arith.maximumf %15, %16 : vector<256x64xf32>
      %18 = arith.truncf %17 : vector<256x64xf32> to vector<256x64xbf16>
      %c0_15 = arith.constant 0 : index
      %c0_16 = arith.constant 0 : index
      %19 = vector.load %arg6[%c0_15, %c0_16] : memref<256x64xbf16, #tpu.memory_space<vmem>>, vector<256x64xbf16>
      tpu.vector_store %arg6[%c0_15, %c0_16], %18 {strides = array<i32>} : memref<256x64xbf16, #tpu.memory_space<vmem>>, vector<256x64xbf16>,
    } else {
    }
    return
  }
  func.func @transform_0(%arg0: i32, %arg1: i32, %arg2: i32) -> (i32, i32) {
    %c0_i32 = arith.constant 0 : i32
    return %arg0, %arg2 : i32, i32
  }
  func.func @transform_1(%arg0: i32, %arg1: i32, %arg2: i32) -> (i32, i32) {
    %c0_i32 = arith.constant 0 : i32
    return %arg2, %arg1 : i32, i32
  }
  func.func @transform_2(%arg0: i32, %arg1: i32, %arg2: i32) -> (i32, i32) {
    %c0_i32 = arith.constant 0 : i32
    %c0_i32_0 = arith.constant 0 : i32
    return %c0_i32, %arg1 : i32, i32
  }
  func.func @transform_3(%arg0: i32, %arg1: i32, %arg2: i32) -> (i32, i32) {
    %c0_i32 = arith.constant 0 : i32
    return %arg0, %arg1 : i32, i32
  }
}

</mosaic_0001>

<llo_original>
// kernel: tpu_custom_call.1
$region0: #{tpu_custom_call.1}
  #allocation0 [shape = 'u32[]', space=smem, size = 0x4, offset = 0x4, fixed_abs, tag = 'smem constant byte address 0x4 - core index']
  #allocation1 [shape = 'u32[72,128]{1,0:T(1,128)}', space=vmem, size = 0x9000, scoped, tag = 'internal scratch']
  #allocation2 [shape = 'f32[256,64]{1,0:T(8,128)}', space=vmem, size = 0x20000, scoped, tag = 'scratch operand']
  %s0 = inlined_call_operand.vmem [shape: bf16[512,147], index: 0, kind: input, shape index: {}]
  %s1 = inlined_call_operand.vmem [shape: bf16[147,64], index: 1, kind: input, shape index: {}]
  %s2 = inlined_call_operand.vmem [shape: f32[1,64], index: 2, kind: input, shape index: {}]
  %s3 = inlined_call_operand.vmem [shape: bf16[512,64], index: 3, kind: output, shape index: {}]
  %s4 = sld [smem:[#allocation0]]
  $region53: #{tpu_custom_call.1} parent=0
    _
  %s6 = ssub.s32 1, %s4
  %s7 = scalar_select 0, %s6, %s4
  loop: start=0, step=1, limit=4
  $region2: #{tpu_custom_call.1} parent=0 // loop_pre_header
    _
  $region3: #{tpu_custom_call.1} parent=0 // loop_header
    %s9 = sphi 0, %s13
    %p10 = scmp.ge.s32.totalorder %s9, 4
    %s16 = sphi 0, %s35
    %s17 = sphi 0, %s31
    %s18 = sphi 0, %s27
    %s19 = sphi 0, %s16
    %s20 = sphi 0, %s17
    %s21 = sphi 0, %s18
    %s22 = sphi 0, %s19
    %s23 = sphi 0, %s20
    %s24 = sphi 0, %s21
    %s40 = sphi 0, %s42
    %s43 = sphi 0, %s40
    %s44 = sphi 0, %s43
    %s60 = sphi 0, %s44
    %s68 = sphi 0, %s70
    %s71 = sphi 0, %s68
    %s72 = sphi 0, %s71
    %s88 = sphi 0, %s72
    %s94 = sphi 0, %s96
    %s97 = sphi 0, %s94
    %s98 = sphi 0, %s97
    %s114 = sphi 0, %s98
    %s122 = sphi 0, %s124
    %s125 = sphi 0, %s122
    %s126 = sphi 0, %s125
    %s142 = sphi 0, %s126
  $region4: #{tpu_custom_call.1} parent=0 // loop_header_branch
    %12 = sbr.rel (%p10) target = $region8
  $region5: #{tpu_custom_call.1} parent=0 // loop_body
    %s14 = ssub.s32 %s9, 1
    %s15 = ssub.s32 %s9, 2
    %s25 = sadd.s32 1, %s18
    %p26 = scmp.ge.s32.totalorder %s25, 1
    %s27 = scalar_select %p26, 0, %s25
    %s28 = sadd.s32 1, %s17
    %s29 = scalar_select %p26, %s28, %s17
    %p30 = scmp.ge.s32.totalorder %s29, 1
    %s31 = scalar_select %p30, 0, %s29
    %s32 = sadd.s32 1, %s16
    %s33 = scalar_select %p30, %s32, %s16
    %p34 = scmp.ge.s32.totalorder %s33, 2
    %s35 = scalar_select %p34, 0, %s33
    %s36 = ssub.s32 %s16, %s35
    %s37 = ssub.s32 %s18, %s27
    %s38 = sor.u32 %s36, %s37
    %p39 = scmp.eq.s32.totalorder %s38, 0
    %s41 = sadd.s32 %s40, 1
    %s42 = scalar_select %p39, %s40, %s41
    %p45 = pneg %p39
    %p46 = scmp.eq.s32.totalorder %s9, 1
    %p47 = por %p45, %p46
    %p48 = scmp.ne.s32.totalorder %s40, %s43
    %p49 = scmp.eq.s32.totalorder %s9, 0
    %p50 = por %p48, %p49
    %p51 = scmp.ne.s32.totalorder %s40, %s43
    %p52 = scmp.eq.s32.totalorder %s14, 1
    %p53 = por %p51, %p52
    %p54 = scmp.ne.s32.totalorder %s43, %s44
    %p55 = scmp.eq.s32.totalorder %s14, 0
    %p56 = por %p54, %p55
    %p57 = scmp.ne.s32.totalorder %s43, %s44
    %p58 = scmp.eq.s32.totalorder %s15, 1
    %p59 = por %p57, %p58
    %p61 = scmp.ne.s32.totalorder %s44, %s60
    %p62 = scmp.eq.s32.totalorder %s15, 0
    %p63 = por %p61, %p62
    %s64 = ssub.s32 %s18, %s27
    %s65 = ssub.s32 %s17, %s31
    %s66 = sor.u32 %s64, %s65
    %p67 = scmp.eq.s32.totalorder %s66, 0
    %s69 = sadd.s32 %s68, 1
    %s70 = scalar_select %p67, %s68, %s69
    %p73 = pneg %p67
    %p74 = scmp.eq.s32.totalorder %s9, 1
    %p75 = por %p73, %p74
    %p76 = scmp.ne.s32.totalorder %s68, %s71
    %p77 = scmp.eq.s32.totalorder %s9, 0
    %p78 = por %p76, %p77
    %p79 = scmp.ne.s32.totalorder %s68, %s71
    %p80 = scmp.eq.s32.totalorder %s14, 1
    %p81 = por %p79, %p80
    %p82 = scmp.ne.s32.totalorder %s71, %s72
    %p83 = scmp.eq.s32.totalorder %s14, 0
    %p84 = por %p82, %p83
    %p85 = scmp.ne.s32.totalorder %s71, %s72
    %p86 = scmp.eq.s32.totalorder %s15, 1
    %p87 = por %p85, %p86
    %p89 = scmp.ne.s32.totalorder %s72, %s88
    %p90 = scmp.eq.s32.totalorder %s15, 0
    %p91 = por %p89, %p90
    %s92 = ssub.s32 %s17, %s31
    %p93 = scmp.eq.s32.totalorder %s92, 0
    %s95 = sadd.s32 %s94, 1
    %s96 = scalar_select %p93, %s94, %s95
    %p99 = pneg %p93
    %p100 = scmp.eq.s32.totalorder %s9, 1
    %p101 = por %p99, %p100
    %p102 = scmp.ne.s32.totalorder %s94, %s97
    %p103 = scmp.eq.s32.totalorder %s9, 0
    %p104 = por %p102, %p103
    %p105 = scmp.ne.s32.totalorder %s94, %s97
    %p106 = scmp.eq.s32.totalorder %s14, 1
    %p107 = por %p105, %p106
    %p108 = scmp.ne.s32.totalorder %s97, %s98
    %p109 = scmp.eq.s32.totalorder %s14, 0
    %p110 = por %p108, %p109
    %p111 = scmp.ne.s32.totalorder %s97, %s98
    %p112 = scmp.eq.s32.totalorder %s15, 1
    %p113 = por %p111, %p112
    %p115 = scmp.ne.s32.totalorder %s98, %s114
    %p116 = scmp.eq.s32.totalorder %s15, 0
    %p117 = por %p115, %p116
    %s118 = ssub.s32 %s16, %s35
    %s119 = ssub.s32 %s17, %s31
    %s120 = sor.u32 %s118, %s119
    %p121 = scmp.eq.s32.totalorder %s120, 0
    %s123 = sadd.s32 %s122, 1
    %s124 = scalar_select %p121, %s122, %s123
    %p127 = pneg %p121
    %p128 = scmp.eq.s32.totalorder %s9, 1
    %p129 = por %p127, %p128
    %p130 = scmp.ne.s32.totalorder %s122, %s125
    %p131 = scmp.eq.s32.totalorder %s9, 0
    %p132 = por %p130, %p131
    %p133 = scmp.ne.s32.totalorder %s122, %s125
    %p134 = scmp.eq.s32.totalorder %s14, 1
    %p135 = por %p133, %p134
    %p136 = scmp.ne.s32.totalorder %s125, %s126
    %p137 = scmp.eq.s32.totalorder %s14, 0
    %p138 = por %p136, %p137
    %p139 = scmp.ne.s32.totalorder %s125, %s126
    %p140 = scmp.eq.s32.totalorder %s15, 1
    %p141 = por %p139, %p140
    %p143 = scmp.ne.s32.totalorder %s126, %s142
    %p144 = scmp.eq.s32.totalorder %s15, 0
    %p145 = por %p143, %p144
    %p146 = scmp.le.s32.totalorder 1, %s9
    %p147 = scmp.lt.s32.totalorder %s9, 3
    %p148 = pnand %p146, %p147
    %p149 = pneg %p148
    // Predicated region
    $region9: #{tpu_custom_call.1} parent=5 // pred_check
      _
    $region10: #{tpu_custom_call.1} parent=5 // pred_check_branch
      %151 = sbr.rel (%p148) target = $region12
    $region11: #{tpu_custom_call.1} parent=5 // pred_region
      %s152 = ssub.s32 %s9, 1
      // Predicated region
      $region13: #{tpu_custom_call.1} parent=11 // pred_check
        %p153 = pneg %p84
      $region14: #{tpu_custom_call.1} parent=11 // pred_check_branch
        %155 = sbr.rel (%p153) target = $region16
      $region15: #{tpu_custom_call.1} parent=11 // pred_region
        %s156 = smul.u32 19, %s21
        %p157 = scmp.lt.s32.totalorder %s156, 18
        %s158 = scalar_select %p157, %s156, 18
        %p159 = scmp.lt.s32.totalorder %s20, 0
        %s160 = scalar_select %p159, %s20, 0
        %s161 = sadd.s32 %s160, %s158
        %s162 = smul.addr %s161, 4
        %s163 = scalar_lea.vmem %s1, %s162
        %s164 = smul.u32 19, %s21
      $region16: #{tpu_custom_call.1} parent=11 // pred_fallthru
        _
      // Predicated region
      $region17: #{tpu_custom_call.1} parent=11 // pred_check
        %p165 = pneg %p110
      $region18: #{tpu_custom_call.1} parent=11 // pred_check_branch
        %167 = sbr.rel (%p165) target = $region20
      $region19: #{tpu_custom_call.1} parent=11 // pred_region
        %p168 = scmp.lt.s32.totalorder %s20, 0
        %s169 = scalar_select %p168, %s20, 0
        %s170 = scalar_lea.vmem %s2, %s169
      $region20: #{tpu_custom_call.1} parent=11 // pred_fallthru
        _
    $region12: #{tpu_custom_call.1} parent=5 // pred_fallthru
      _
    %p171 = scmp.lt.s32.totalorder %s9, 2
    // Predicated region
    $region21: #{tpu_custom_call.1} parent=5 // pred_check
      %p172 = pneg %p171
    $region22: #{tpu_custom_call.1} parent=5 // pred_check_branch
      %174 = sbr.rel (%p172) target = $region24
    $region23: #{tpu_custom_call.1} parent=5 // pred_region
      // Predicated region
      $region25: #{tpu_custom_call.1} parent=23 // pred_check
        %p175 = pneg %p50
      $region26: #{tpu_custom_call.1} parent=23 // pred_check_branch
        %177 = sbr.rel (%p175) target = $region28
      $region27: #{tpu_custom_call.1} parent=23 // pred_region
        %s178 = smul.u32 32, %s16
        %s179 = smul.u32 2, %s18
        %p180 = scmp.lt.s32.totalorder %s178, 63
        %s181 = scalar_select %p180, %s178, 63
        %p182 = scmp.lt.s32.totalorder %s179, 1
        %s183 = scalar_select %p182, %s179, 1
        %s184 = smul.addr %s181, 2
        %s185 = sadd.s32 %s183, %s184
        %s186 = smul.addr %s185, 4
        %s187 = scalar_lea.vmem %s0, %s186
        %s188 = smul.u32 32, %s16
        %s189 = smul.u32 2, %s18
      $region28: #{tpu_custom_call.1} parent=23 // pred_fallthru
        _
    $region24: #{tpu_custom_call.1} parent=5 // pred_fallthru
      _
    %p190 = scmp.le.s32.totalorder 1, %s9
    %p191 = scmp.lt.s32.totalorder %s9, 3
    %p192 = pnand %p190, %p191
    %p193 = pneg %p192
    // Predicated region
    $region29: #{tpu_custom_call.1} parent=5 // pred_check
      _
    $region30: #{tpu_custom_call.1} parent=5 // pred_check_branch
      %195 = sbr.rel (%p192) target = $region32
    $region31: #{tpu_custom_call.1} parent=5 // pred_region
      %s196 = ssub.s32 %s9, 1
      %s197 = smul.u32 32, %s19
      %s198 = smul.u32 2, %s21
      %p199 = scmp.lt.s32.totalorder %s197, 63
      %s200 = scalar_select %p199, %s197, 63
      %p201 = scmp.lt.s32.totalorder %s198, 1
      %s202 = scalar_select %p201, %s198, 1
      %s203 = smul.addr %s200, 2
      %s204 = sadd.s32 %s202, %s203
      %s205 = smul.addr %s204, 4
      %s206 = scalar_lea.vmem %s0, %s205
      %p207 = pneg %p56
      %p208 = pneg %p53
      %s209 = smul.u32 19, %s21
      %p210 = scmp.lt.s32.totalorder %s209, 18
      %s211 = scalar_select %p210, %s209, 18
      %p212 = scmp.lt.s32.totalorder %s20, 0
      %s213 = scalar_select %p212, %s20, 0
      %s214 = sadd.s32 %s213, %s211
      %s215 = smul.addr %s214, 4
      %s216 = scalar_lea.vmem %s1, %s215
      %p217 = pneg %p84
      %p218 = pneg %p81
      %p219 = scmp.lt.s32.totalorder %s20, 0
      %s220 = scalar_select %p219, %s20, 0
      %s221 = scalar_lea.vmem %s2, %s220
      %p222 = pneg %p110
      %p223 = pneg %p107
      %p224 = pneg %p138
      %p225 = pneg %p135
      %s226 = smul.u32 32, %s19
      %p227 = scmp.lt.s32.totalorder %s226, 63
      %s228 = scalar_select %p227, %s226, 63
      %p229 = scmp.lt.s32.totalorder %s20, 0
      %s230 = scalar_select %p229, %s20, 0
      %s231 = sadd.s32 %s230, %s228
      %s232 = smul.addr %s231, 4
      %s233 = scalar_lea.vmem %s3, %s232
      %s234 = smul.u32 32, %s19
      %s235 = smul.u32 2, %s21
      %p236 = scmp.lt.s32.totalorder %s234, 63
      %s237 = scalar_select %p236, %s234, 63
      %p238 = scmp.lt.s32.totalorder %s235, 1
      %s239 = scalar_select %p238, %s235, 1
      %s240 = smul.addr %s237, 2
      %s241 = sadd.s32 %s239, %s240
      %s242 = smul.addr %s241, 4
      %s243 = scalar_lea.vmem %s0, %s242
      %s244 = smul.u32 32, %s19
      %s245 = smul.u32 2, %s21
      %s246 = smul.u32 19, %s21
      %p247 = scmp.lt.s32.totalorder %s246, 18
      %s248 = scalar_select %p247, %s246, 18
      %p249 = scmp.lt.s32.totalorder %s20, 0
      %s250 = scalar_select %p249, %s20, 0
      %s251 = sadd.s32 %s250, %s248
      %s252 = smul.addr %s251, 4
      %s253 = scalar_lea.vmem %s1, %s252
      %s254 = smul.u32 19, %s21
      %p255 = scmp.lt.s32.totalorder %s20, 0
      %s256 = scalar_select %p255, %s20, 0
      %s257 = scalar_lea.vmem %s2, %s256
      %s258 = smul.u32 32, %s19
      %p259 = scmp.lt.s32.totalorder %s258, 63
      %s260 = scalar_select %p259, %s258, 63
      %p261 = scmp.lt.s32.totalorder %s20, 0
      %s262 = scalar_select %p261, %s20, 0
      %s263 = sadd.s32 %s262, %s260
      %s264 = smul.addr %s263, 4
      %s265 = scalar_lea.vmem %s3, %s264
      %s266 = smul.u32 32, %s19
      %p268 = scmp.eq.s32.totalorder %s21, 0
      // Predicated region
      $region33: #{tpu_custom_call.1} parent=31 // pred_check
        %p269 = pneg %p268
      $region34: #{tpu_custom_call.1} parent=31 // pred_check_branch
        %271 = sbr.rel (%p269) target = $region36
      $region35: #{tpu_custom_call.1} parent=31 // pred_region
        %vm272 = vcmask 523264
        %273 = vst.msk [vmem:[#allocation2] sm:$0xff] %vm272, 0.0
        %274 = vst.msk [vmem:[#allocation2 + $0x8] sm:$0xff] %vm272, 0.0
        %275 = vst.msk [vmem:[#allocation2 + $0x10] sm:$0xff] %vm272, 0.0
        %276 = vst.msk [vmem:[#allocation2 + $0x18] sm:$0xff] %vm272, 0.0
        %277 = vst.msk [vmem:[#allocation2 + $0x20] sm:$0xff] %vm272, 0.0
        %278 = vst.msk [vmem:[#allocation2 + $0x28] sm:$0xff] %vm272, 0.0
        %279 = vst.msk [vmem:[#allocation2 + $0x30] sm:$0xff] %vm272, 0.0
        %280 = vst.msk [vmem:[#allocation2 + $0x38] sm:$0xff] %vm272, 0.0
        %281 = vst.msk [vmem:[#allocation2 + $0x40] sm:$0xff] %vm272, 0.0
        %282 = vst.msk [vmem:[#allocation2 + $0x48] sm:$0xff] %vm272, 0.0
        %283 = vst.msk [vmem:[#allocation2 + $0x50] sm:$0xff] %vm272, 0.0
        %284 = vst.msk [vmem:[#allocation2 + $0x58] sm:$0xff] %vm272, 0.0
        %285 = vst.msk [vmem:[#allocation2 + $0x60] sm:$0xff] %vm272, 0.0
        %286 = vst.msk [vmem:[#allocation2 + $0x68] sm:$0xff] %vm272, 0.0
        %287 = vst.msk [vmem:[#allocation2 + $0x70] sm:$0xff] %vm272, 0.0
        %288 = vst.msk [vmem:[#allocation2 + $0x78] sm:$0xff] %vm272, 0.0
        %289 = vst.msk [vmem:[#allocation2 + $0x80] sm:$0xff] %vm272, 0.0
        %290 = vst.msk [vmem:[#allocation2 + $0x88] sm:$0xff] %vm272, 0.0
        %291 = vst.msk [vmem:[#allocation2 + $0x90] sm:$0xff] %vm272, 0.0
        %292 = vst.msk [vmem:[#allocation2 + $0x98] sm:$0xff] %vm272, 0.0
        %293 = vst.msk [vmem:[#allocation2 + $0xa0] sm:$0xff] %vm272, 0.0
        %294 = vst.msk [vmem:[#allocation2 + $0xa8] sm:$0xff] %vm272, 0.0
        %295 = vst.msk [vmem:[#allocation2 + $0xb0] sm:$0xff] %vm272, 0.0
        %296 = vst.msk [vmem:[#allocation2 + $0xb8] sm:$0xff] %vm272, 0.0
        %297 = vst.msk [vmem:[#allocation2 + $0xc0] sm:$0xff] %vm272, 0.0
        %298 = vst.msk [vmem:[#allocation2 + $0xc8] sm:$0xff] %vm272, 0.0
        %299 = vst.msk [vmem:[#allocation2 + $0xd0] sm:$0xff] %vm272, 0.0
        %300 = vst.msk [vmem:[#allocation2 + $0xd8] sm:$0xff] %vm272, 0.0
        %301 = vst.msk [vmem:[#allocation2 + $0xe0] sm:$0xff] %vm272, 0.0
        %302 = vst.msk [vmem:[#allocation2 + $0xe8] sm:$0xff] %vm272, 0.0
        %303 = vst.msk [vmem:[#allocation2 + $0xf0] sm:$0xff] %vm272, 0.0
        %304 = vst.msk [vmem:[#allocation2 + $0xf8] sm:$0xff] %vm272, 0.0
      $region36: #{tpu_custom_call.1} parent=31 // pred_fallthru
        _
      %v305 = vld [vmem:[#allocation2] sm:$0xff]
      %v306 = vld [vmem:[#allocation2 + $0x8] sm:$0xff]
      %v307 = vld [vmem:[#allocation2 + $0x10] sm:$0xff]
      %v308 = vld [vmem:[#allocation2 + $0x18] sm:$0xff]
      %v309 = vld [vmem:[#allocation2 + $0x20] sm:$0xff]
      %v310 = vld [vmem:[#allocation2 + $0x28] sm:$0xff]
      %v311 = vld [vmem:[#allocation2 + $0x30] sm:$0xff]
      %v312 = vld [vmem:[#allocation2 + $0x38] sm:$0xff]
      %v313 = vld [vmem:[#allocation2 + $0x40] sm:$0xff]
      %v314 = vld [vmem:[#allocation2 + $0x48] sm:$0xff]
      %v315 = vld [vmem:[#allocation2 + $0x50] sm:$0xff]
      %v316 = vld [vmem:[#allocation2 + $0x58] sm:$0xff]
      %v317 = vld [vmem:[#allocation2 + $0x60] sm:$0xff]
      %v318 = vld [vmem:[#allocation2 + $0x68] sm:$0xff]
      %v319 = vld [vmem:[#allocation2 + $0x70] sm:$0xff]
      %v320 = vld [vmem:[#allocation2 + $0x78] sm:$0xff]
      %v321 = vld [vmem:[#allocation2 + $0x80] sm:$0xff]
      %v322 = vld [vmem:[#allocation2 + $0x88] sm:$0xff]
      %v323 = vld [vmem:[#allocation2 + $0x90] sm:$0xff]
      %v324 = vld [vmem:[#allocation2 + $0x98] sm:$0xff]
      %v325 = vld [vmem:[#allocation2 + $0xa0] sm:$0xff]
      %v326 = vld [vmem:[#allocation2 + $0xa8] sm:$0xff]
      %v327 = vld [vmem:[#allocation2 + $0xb0] sm:$0xff]
      %v328 = vld [vmem:[#allocation2 + $0xb8] sm:$0xff]
      %v329 = vld [vmem:[#allocation2 + $0xc0] sm:$0xff]
      %v330 = vld [vmem:[#allocation2 + $0xc8] sm:$0xff]
      %v331 = vld [vmem:[#allocation2 + $0xd0] sm:$0xff]
      %v332 = vld [vmem:[#allocation2 + $0xd8] sm:$0xff]
      %v333 = vld [vmem:[#allocation2 + $0xe0] sm:$0xff]
      %v334 = vld [vmem:[#allocation2 + $0xe8] sm:$0xff]
      %v335 = vld [vmem:[#allocation2 + $0xf0] sm:$0xff]
      %v336 = vld [vmem:[#allocation2 + $0xf8] sm:$0xff]
      %v337 = vld [vmem:[%s243] sm:$0xff]
      %v338 = vld [vmem:[%s243 + $0x8] sm:$0xff]
      %v339 = vld [vmem:[%s243 + $0x10] sm:$0xff]
      %v340 = vld [vmem:[%s243 + $0x18] sm:$0xff]
      %v341 = vld [vmem:[%s243 + $0x20] sm:$0xff]
      %v342 = vld [vmem:[%s243 + $0x28] sm:$0xff]
      %v343 = vld [vmem:[%s243 + $0x30] sm:$0xff]
      %v344 = vld [vmem:[%s243 + $0x38] sm:$0xff]
      %v345 = vld [vmem:[%s243 + $0x40] sm:$0xff]
      %v346 = vld [vmem:[%s243 + $0x48] sm:$0xff]
      %v347 = vld [vmem:[%s243 + $0x50] sm:$0xff]
      %v348 = vld [vmem:[%s243 + $0x58] sm:$0xff]
      %v349 = vld [vmem:[%s243 + $0x60] sm:$0xff]
      %v350 = vld [vmem:[%s243 + $0x68] sm:$0xff]
      %v351 = vld [vmem:[%s243 + $0x70] sm:$0xff]
      %v352 = vld [vmem:[%s243 + $0x78] sm:$0xff]
      %v353 = vld [vmem:[%s243 + $0x80] sm:$0xff]
      %v354 = vld [vmem:[%s243 + $0x88] sm:$0xff]
      %v355 = vld [vmem:[%s243 + $0x90] sm:$0xff]
      %v356 = vld [vmem:[%s243 + $0x98] sm:$0xff]
      %v357 = vld [vmem:[%s243 + $0xa0] sm:$0xff]
      %v358 = vld [vmem:[%s243 + $0xa8] sm:$0xff]
      %v359 = vld [vmem:[%s243 + $0xb0] sm:$0xff]
      %v360 = vld [vmem:[%s243 + $0xb8] sm:$0xff]
      %v361 = vld [vmem:[%s243 + $0xc0] sm:$0xff]
      %v362 = vld [vmem:[%s243 + $0xc8] sm:$0xff]
      %v363 = vld [vmem:[%s243 + $0xd0] sm:$0xff]
      %v364 = vld [vmem:[%s243 + $0xd8] sm:$0xff]
      %v365 = vld [vmem:[%s243 + $0xe0] sm:$0xff]
      %v366 = vld [vmem:[%s243 + $0xe8] sm:$0xff]
      %v367 = vld [vmem:[%s243 + $0xf0] sm:$0xff]
      %v368 = vld [vmem:[%s243 + $0xf8] sm:$0xff]
      %v369 = vld [vmem:[%s253] sm:$0xf]
      %v370 = vld [vmem:[%s253 + $0x4] sm:$0xf]
      %v371 = vld [vmem:[%s253 + $0x8] sm:$0xf]
      %v372 = vld [vmem:[%s253 + $0xc] sm:$0xf]
      %v373 = vld [vmem:[%s253 + $0x10] sm:$0xf]
      %v374 = vld [vmem:[%s253 + $0x14] sm:$0xf]
      %v375 = vld [vmem:[%s253 + $0x18] sm:$0xf]
      %v376 = vld [vmem:[%s253 + $0x1c] sm:$0xf]
      %v377 = vld [vmem:[%s253 + $0x20] sm:$0xf]
      %v378 = vld [vmem:[%s253 + $0x24] sm:$0xf]
      %v379 = vld [vmem:[%s253 + $0x28] sm:$0xf]
      %v380 = vld [vmem:[%s253 + $0x2c] sm:$0xf]
      %v381 = vld [vmem:[%s253 + $0x30] sm:$0xf]
      %v382 = vld [vmem:[%s253 + $0x34] sm:$0xf]
      %v383 = vld [vmem:[%s253 + $0x38] sm:$0xf]
      %v384 = vld [vmem:[%s253 + $0x3c] sm:$0xf]
      %v385 = vld [vmem:[%s253 + $0x40] sm:$0xf]
      %v386 = vld [vmem:[%s253 + $0x44] sm:$0xf]
      %v387 = vld [vmem:[%s253 + $0x48] sm:$0x3]
      %v420 = vunpack.c.l.b16 %v337
      %v421 = vunpack.c.h.b16 %v337
      %v422 = vunpack.c.l.b16 %v338
      %v423 = vunpack.c.h.b16 %v338
      %v424 = vunpack.c.l.b16 %v339
      %v425 = vunpack.c.h.b16 %v339
      %v426 = vunpack.c.l.b16 %v340
      %v427 = vunpack.c.h.b16 %v340
      %v428 = vunpack.c.l.b16 %v341
      %v429 = vunpack.c.h.b16 %v341
      %v430 = vunpack.c.l.b16 %v342
      %v431 = vunpack.c.h.b16 %v342
      %v432 = vunpack.c.l.b16 %v343
      %v433 = vunpack.c.h.b16 %v343
      %v434 = vunpack.c.l.b16 %v344
      %v435 = vunpack.c.h.b16 %v344
      %v436 = vunpack.c.l.b16 %v345
      %v437 = vunpack.c.h.b16 %v345
      %v438 = vunpack.c.l.b16 %v346
      %v439 = vunpack.c.h.b16 %v346
      %v440 = vunpack.c.l.b16 %v347
      %v441 = vunpack.c.h.b16 %v347
      %v442 = vunpack.c.l.b16 %v348
      %v443 = vunpack.c.h.b16 %v348
      %v444 = vunpack.c.l.b16 %v349
      %v445 = vunpack.c.h.b16 %v349
      %v446 = vunpack.c.l.b16 %v350
      %v447 = vunpack.c.h.b16 %v350
      %v448 = vunpack.c.l.b16 %v351
      %v449 = vunpack.c.h.b16 %v351
      %v450 = vunpack.c.l.b16 %v352
      %v451 = vunpack.c.h.b16 %v352
      %v452 = vunpack.c.l.b16 %v353
      %v453 = vunpack.c.h.b16 %v353
      %v454 = vunpack.c.l.b16 %v354
      %v455 = vunpack.c.h.b16 %v354
      %v456 = vunpack.c.l.b16 %v355
      %v457 = vunpack.c.h.b16 %v355
      %v458 = vunpack.c.l.b16 %v356
      %v459 = vunpack.c.h.b16 %v356
      %v460 = vunpack.c.l.b16 %v357
      %v461 = vunpack.c.h.b16 %v357
      %v462 = vunpack.c.l.b16 %v358
      %v463 = vunpack.c.h.b16 %v358
      %v464 = vunpack.c.l.b16 %v359
      %v465 = vunpack.c.h.b16 %v359
      %v466 = vunpack.c.l.b16 %v360
      %v467 = vunpack.c.h.b16 %v360
      %v468 = vunpack.c.l.b16 %v361
      %v469 = vunpack.c.h.b16 %v361
      %v470 = vunpack.c.l.b16 %v362
      %v471 = vunpack.c.h.b16 %v362
      %v472 = vunpack.c.l.b16 %v363
      %v473 = vunpack.c.h.b16 %v363
      %v474 = vunpack.c.l.b16 %v364
      %v475 = vunpack.c.h.b16 %v364
      %v476 = vunpack.c.l.b16 %v365
      %v477 = vunpack.c.h.b16 %v365
      %v478 = vunpack.c.l.b16 %v366
      %v479 = vunpack.c.h.b16 %v366
      %v480 = vunpack.c.l.b16 %v367
      %v481 = vunpack.c.h.b16 %v367
      %v482 = vunpack.c.l.b16 %v368
      %v483 = vunpack.c.h.b16 %v368
      %v484 = vpack.c.b16 %v422, %v420
      %v485 = vpack.c.b16 %v423, %v421
      %v486 = vpack.c.b16 %v426, %v424
      %v487 = vpack.c.b16 %v427, %v425
      %v488 = vpack.c.b16 %v430, %v428
      %v489 = vpack.c.b16 %v431, %v429
      %v490 = vpack.c.b16 %v434, %v432
      %v491 = vpack.c.b16 %v435, %v433
      %v492 = vpack.c.b16 %v438, %v436
      %v493 = vpack.c.b16 %v439, %v437
      %v494 = vpack.c.b16 %v442, %v440
      %v495 = vpack.c.b16 %v443, %v441
      %v496 = vpack.c.b16 %v446, %v444
      %v497 = vpack.c.b16 %v447, %v445
      %v498 = vpack.c.b16 %v450, %v448
      %v499 = vpack.c.b16 %v451, %v449
      %v500 = vpack.c.b16 %v454, %v452
      %v501 = vpack.c.b16 %v455, %v453
      %v502 = vpack.c.b16 %v458, %v456
      %v503 = vpack.c.b16 %v459, %v457
      %v504 = vpack.c.b16 %v462, %v460
      %v505 = vpack.c.b16 %v463, %v461
      %v506 = vpack.c.b16 %v466, %v464
      %v507 = vpack.c.b16 %v467, %v465
      %v508 = vpack.c.b16 %v470, %v468
      %v509 = vpack.c.b16 %v471, %v469
      %v510 = vpack.c.b16 %v474, %v472
      %v511 = vpack.c.b16 %v475, %v473
      %v512 = vpack.c.b16 %v478, %v476
      %v513 = vpack.c.b16 %v479, %v477
      %v514 = vpack.c.b16 %v482, %v480
      %v515 = vpack.c.b16 %v483, %v481
      %v551 = vunpack.c.l.b16 %v369
      %v552 = vunpack.c.l.b16 %v370
      %v553 = vunpack.c.l.b16 %v371
      %v554 = vunpack.c.l.b16 %v372
      %v555 = vunpack.c.l.b16 %v373
      %v556 = vunpack.c.l.b16 %v374
      %v557 = vunpack.c.l.b16 %v375
      %v558 = vunpack.c.l.b16 %v376
      %v559 = vunpack.c.l.b16 %v377
      %v560 = vunpack.c.l.b16 %v378
      %v561 = vunpack.c.l.b16 %v379
      %v562 = vunpack.c.l.b16 %v380
      %v563 = vunpack.c.l.b16 %v381
      %v564 = vunpack.c.l.b16 %v382
      %v565 = vunpack.c.l.b16 %v383
      %v566 = vunpack.c.l.b16 %v384
      %v567 = vunpack.c.l.b16 %v385
      %v568 = vunpack.c.l.b16 %v386
      %v569 = vunpack.c.l.b16 %v387
      %v570 = vpack.c.b16 %v552, %v551
      %v571 = vpack.c.b16 %v554, %v553
      %v572 = vpack.c.b16 %v556, %v555
      %v573 = vpack.c.b16 %v558, %v557
      %v574 = vpack.c.b16 %v560, %v559
      %v575 = vpack.c.b16 %v562, %v561
      %v576 = vpack.c.b16 %v564, %v563
      %v577 = vpack.c.b16 %v566, %v565
      %v578 = vpack.c.b16 %v568, %v567
      %v579 = vpack.c.b16 %v569, %v569
      %vm589 = vcmask 154624
      %v591 = vsel %vm589, %v485, 0
      %v594 = vsel %vm589, %v487, 0
      %v597 = vsel %vm589, %v489, 0
      %v600 = vsel %vm589, %v491, 0
      %v603 = vsel %vm589, %v493, 0
      %v606 = vsel %vm589, %v495, 0
      %v609 = vsel %vm589, %v497, 0
      %v612 = vsel %vm589, %v499, 0
      %v615 = vsel %vm589, %v501, 0
      %v618 = vsel %vm589, %v503, 0
      %v621 = vsel %vm589, %v505, 0
      %v624 = vsel %vm589, %v507, 0
      %v627 = vsel %vm589, %v509, 0
      %v630 = vsel %vm589, %v511, 0
      %v633 = vsel %vm589, %v513, 0
      %v636 = vsel %vm589, %v515, 0
      %vm638 = vcmask 1040384
      %vm639 = vcmask 1041408
      %v640 = vsel %vm638, 4294967295, 65535
      %v641 = vsel %vm639, %v640, 0
      %v643 = vand.u32 %v579, %v641
      %645 = vmatpush.bf16.msra.mxu0 %v577
      %646 = vmatpush.bf16.msra.mxu0 %v576
      %647 = vmatpush.bf16.msra.mxu0 %v575
      %648 = vmatpush.bf16.msra.mxu0 %v574
      %649 = vmatpush.bf16.msra.mxu0 %v573
      %650 = vmatpush.bf16.msra.mxu0 %v572
      %651 = vmatpush.bf16.msra.mxu0 %v571
      %652 = vmatpush.bf16.msra.mxu0 %v570
      %653 = vmatmul.bf16.gmra.mxu0 %v484
      %v654 = vpop.f32.mrf.mxu0
      %v655 = vadd.f32 0.0, %v654
      %v656 = vpop.f32.mrf.mxu0
      %v657 = vadd.f32 0.0, %v656
      %658 = vmatmul.bf16.gmra.mxu0 %v486
      %v659 = vpop.f32.mrf.mxu0
      %v660 = vadd.f32 0.0, %v659
      %v661 = vpop.f32.mrf.mxu0
      %v662 = vadd.f32 0.0, %v661
      %663 = vmatmul.bf16.gmra.mxu0 %v488
      %v664 = vpop.f32.mrf.mxu0
      %v665 = vadd.f32 0.0, %v664
      %v666 = vpop.f32.mrf.mxu0
      %v667 = vadd.f32 0.0, %v666
      %668 = vmatmul.bf16.gmra.mxu0 %v490
      %v669 = vpop.f32.mrf.mxu0
      %v670 = vadd.f32 0.0, %v669
      %v671 = vpop.f32.mrf.mxu0
      %v672 = vadd.f32 0.0, %v671
      %673 = vmatmul.bf16.gmra.mxu0 %v492
      %v674 = vpop.f32.mrf.mxu0
      %v675 = vadd.f32 0.0, %v674
      %v676 = vpop.f32.mrf.mxu0
      %v677 = vadd.f32 0.0, %v676
      %678 = vmatmul.bf16.gmra.mxu0 %v494
      %v679 = vpop.f32.mrf.mxu0
      %v680 = vadd.f32 0.0, %v679
      %v681 = vpop.f32.mrf.mxu0
      %v682 = vadd.f32 0.0, %v681
      %683 = vmatmul.bf16.gmra.mxu0 %v496
      %v684 = vpop.f32.mrf.mxu0
      %v685 = vadd.f32 0.0, %v684
      %v686 = vpop.f32.mrf.mxu0
      %v687 = vadd.f32 0.0, %v686
      %688 = vmatmul.bf16.gmra.mxu0 %v498
      %v689 = vpop.f32.mrf.mxu0
      %v690 = vadd.f32 0.0, %v689
      %v691 = vpop.f32.mrf.mxu0
      %v692 = vadd.f32 0.0, %v691
      %693 = vmatmul.bf16.gmra.mxu0 %v500
      %v694 = vpop.f32.mrf.mxu0
      %v695 = vadd.f32 0.0, %v694
      %v696 = vpop.f32.mrf.mxu0
      %v697 = vadd.f32 0.0, %v696
      %698 = vmatmul.bf16.gmra.mxu0 %v502
      %v699 = vpop.f32.mrf.mxu0
      %v700 = vadd.f32 0.0, %v699
      %v701 = vpop.f32.mrf.mxu0
      %v702 = vadd.f32 0.0, %v701
      %703 = vmatmul.bf16.gmra.mxu0 %v504
      %v704 = vpop.f32.mrf.mxu0
      %v705 = vadd.f32 0.0, %v704
      %v706 = vpop.f32.mrf.mxu0
      %v707 = vadd.f32 0.0, %v706
      %708 = vmatmul.bf16.gmra.mxu0 %v506
      %v709 = vpop.f32.mrf.mxu0
      %v710 = vadd.f32 0.0, %v709
      %v711 = vpop.f32.mrf.mxu0
      %v712 = vadd.f32 0.0, %v711
      %713 = vmatmul.bf16.gmra.mxu0 %v508
      %v714 = vpop.f32.mrf.mxu0
      %v715 = vadd.f32 0.0, %v714
      %v716 = vpop.f32.mrf.mxu0
      %v717 = vadd.f32 0.0, %v716
      %718 = vmatmul.bf16.gmra.mxu0 %v510
      %v719 = vpop.f32.mrf.mxu0
      %v720 = vadd.f32 0.0, %v719
      %v721 = vpop.f32.mrf.mxu0
      %v722 = vadd.f32 0.0, %v721
      %723 = vmatmul.bf16.gmra.mxu0 %v512
      %v724 = vpop.f32.mrf.mxu0
      %v725 = vadd.f32 0.0, %v724
      %v726 = vpop.f32.mrf.mxu0
      %v727 = vadd.f32 0.0, %v726
      %728 = vmatmul.bf16.gmra.mxu0 %v514
      %v729 = vpop.f32.mrf.mxu0
      %v730 = vadd.f32 0.0, %v729
      %v731 = vpop.f32.mrf.mxu0
      %v732 = vadd.f32 0.0, %v731
      %733 = vdwg.mxu0
      %734 = vmatpush.bf16.msra.mxu0 0
      %735 = vmatpush.bf16.msra.mxu0 0
      %736 = vmatpush.bf16.msra.mxu0 0
      %737 = vmatpush.bf16.msra.mxu0 0
      %738 = vmatpush.bf16.msra.mxu0 0
      %739 = vmatpush.bf16.msra.mxu0 0
      %740 = vmatpush.bf16.msra.mxu0 %v643
      %741 = vmatpush.bf16.msra.mxu0 %v578
      %742 = vmatmul.bf16.gmra.mxu0 %v591
      %v743 = vpop.f32.mrf.mxu0
      %v744 = vadd.f32 %v655, %v743
      %v745 = vpop.f32.mrf.mxu0
      %v746 = vadd.f32 %v657, %v745
      %747 = vmatmul.bf16.gmra.mxu0 %v594
      %v748 = vpop.f32.mrf.mxu0
      %v749 = vadd.f32 %v660, %v748
      %v750 = vpop.f32.mrf.mxu0
      %v751 = vadd.f32 %v662, %v750
      %752 = vmatmul.bf16.gmra.mxu0 %v597
      %v753 = vpop.f32.mrf.mxu0
      %v754 = vadd.f32 %v665, %v753
      %v755 = vpop.f32.mrf.mxu0
      %v756 = vadd.f32 %v667, %v755
      %757 = vmatmul.bf16.gmra.mxu0 %v600
      %v758 = vpop.f32.mrf.mxu0
      %v759 = vadd.f32 %v670, %v758
      %v760 = vpop.f32.mrf.mxu0
      %v761 = vadd.f32 %v672, %v760
      %762 = vmatmul.bf16.gmra.mxu0 %v603
      %v763 = vpop.f32.mrf.mxu0
      %v764 = vadd.f32 %v675, %v763
      %v765 = vpop.f32.mrf.mxu0
      %v766 = vadd.f32 %v677, %v765
      %767 = vmatmul.bf16.gmra.mxu0 %v606
      %v768 = vpop.f32.mrf.mxu0
      %v769 = vadd.f32 %v680, %v768
      %v770 = vpop.f32.mrf.mxu0
      %v771 = vadd.f32 %v682, %v770
      %772 = vmatmul.bf16.gmra.mxu0 %v609
      %v773 = vpop.f32.mrf.mxu0
      %v774 = vadd.f32 %v685, %v773
      %v775 = vpop.f32.mrf.mxu0
      %v776 = vadd.f32 %v687, %v775
      %777 = vmatmul.bf16.gmra.mxu0 %v612
      %v778 = vpop.f32.mrf.mxu0
      %v779 = vadd.f32 %v690, %v778
      %v780 = vpop.f32.mrf.mxu0
      %v781 = vadd.f32 %v692, %v780
      %782 = vmatmul.bf16.gmra.mxu0 %v615
      %v783 = vpop.f32.mrf.mxu0
      %v784 = vadd.f32 %v695, %v783
      %v785 = vpop.f32.mrf.mxu0
      %v786 = vadd.f32 %v697, %v785
      %787 = vmatmul.bf16.gmra.mxu0 %v618
      %v788 = vpop.f32.mrf.mxu0
      %v789 = vadd.f32 %v700, %v788
      %v790 = vpop.f32.mrf.mxu0
      %v791 = vadd.f32 %v702, %v790
      %792 = vmatmul.bf16.gmra.mxu0 %v621
      %v793 = vpop.f32.mrf.mxu0
      %v794 = vadd.f32 %v705, %v793
      %v795 = vpop.f32.mrf.mxu0
      %v796 = vadd.f32 %v707, %v795
      %797 = vmatmul.bf16.gmra.mxu0 %v624
      %v798 = vpop.f32.mrf.mxu0
      %v799 = vadd.f32 %v710, %v798
      %v800 = vpop.f32.mrf.mxu0
      %v801 = vadd.f32 %v712, %v800
      %802 = vmatmul.bf16.gmra.mxu0 %v627
      %v803 = vpop.f32.mrf.mxu0
      %v804 = vadd.f32 %v715, %v803
      %v805 = vpop.f32.mrf.mxu0
      %v806 = vadd.f32 %v717, %v805
      %807 = vmatmul.bf16.gmra.mxu0 %v630
      %v808 = vpop.f32.mrf.mxu0
      %v809 = vadd.f32 %v720, %v808
      %v810 = vpop.f32.mrf.mxu0
      %v811 = vadd.f32 %v722, %v810
      %812 = vmatmul.bf16.gmra.mxu0 %v633
      %v813 = vpop.f32.mrf.mxu0
      %v814 = vadd.f32 %v725, %v813
      %v815 = vpop.f32.mrf.mxu0
      %v816 = vadd.f32 %v727, %v815
      %817 = vmatmul.bf16.gmra.mxu0 %v636
      %v818 = vpop.f32.mrf.mxu0
      %v819 = vadd.f32 %v730, %v818
      %v820 = vpop.f32.mrf.mxu0
      %v821 = vadd.f32 %v732, %v820
      %822 = vdwg.mxu0
      %v823 = vadd.f32 %v305, %v744
      %v824 = vadd.f32 %v306, %v746
      %v825 = vadd.f32 %v307, %v749
      %v826 = vadd.f32 %v308, %v751
      %v827 = vadd.f32 %v309, %v754
      %v828 = vadd.f32 %v310, %v756
      %v829 = vadd.f32 %v311, %v759
      %v830 = vadd.f32 %v312, %v761
      %v831 = vadd.f32 %v313, %v764
      %v832 = vadd.f32 %v314, %v766
      %v833 = vadd.f32 %v315, %v769
      %v834 = vadd.f32 %v316, %v771
      %v835 = vadd.f32 %v317, %v774
      %v836 = vadd.f32 %v318, %v776
      %v837 = vadd.f32 %v319, %v779
      %v838 = vadd.f32 %v320, %v781
      %v839 = vadd.f32 %v321, %v784
      %v840 = vadd.f32 %v322, %v786
      %v841 = vadd.f32 %v323, %v789
      %v842 = vadd.f32 %v324, %v791
      %v843 = vadd.f32 %v325, %v794
      %v844 = vadd.f32 %v326, %v796
      %v845 = vadd.f32 %v327, %v799
      %v846 = vadd.f32 %v328, %v801
      %v847 = vadd.f32 %v329, %v804
      %v848 = vadd.f32 %v330, %v806
      %v849 = vadd.f32 %v331, %v809
      %v850 = vadd.f32 %v332, %v811
      %v851 = vadd.f32 %v333, %v814
      %v852 = vadd.f32 %v334, %v816
      %v853 = vadd.f32 %v335, %v819
      %v854 = vadd.f32 %v336, %v821
      %vm855 = vcmask 523264
      %856 = vst.msk [vmem:[#allocation2] sm:$0xff] %vm855, %v823
      %857 = vst.msk [vmem:[#allocation2 + $0x8] sm:$0xff] %vm855, %v824
      %858 = vst.msk [vmem:[#allocation2 + $0x10] sm:$0xff] %vm855, %v825
      %859 = vst.msk [vmem:[#allocation2 + $0x18] sm:$0xff] %vm855, %v826
      %860 = vst.msk [vmem:[#allocation2 + $0x20] sm:$0xff] %vm855, %v827
      %861 = vst.msk [vmem:[#allocation2 + $0x28] sm:$0xff] %vm855, %v828
      %862 = vst.msk [vmem:[#allocation2 + $0x30] sm:$0xff] %vm855, %v829
      %863 = vst.msk [vmem:[#allocation2 + $0x38] sm:$0xff] %vm855, %v830
      %864 = vst.msk [vmem:[#allocation2 + $0x40] sm:$0xff] %vm855, %v831
      %865 = vst.msk [vmem:[#allocation2 + $0x48] sm:$0xff] %vm855, %v832
      %866 = vst.msk [vmem:[#allocation2 + $0x50] sm:$0xff] %vm855, %v833
      %867 = vst.msk [vmem:[#allocation2 + $0x58] sm:$0xff] %vm855, %v834
      %868 = vst.msk [vmem:[#allocation2 + $0x60] sm:$0xff] %vm855, %v835
      %869 = vst.msk [vmem:[#allocation2 + $0x68] sm:$0xff] %vm855, %v836
      %870 = vst.msk [vmem:[#allocation2 + $0x70] sm:$0xff] %vm855, %v837
      %871 = vst.msk [vmem:[#allocation2 + $0x78] sm:$0xff] %vm855, %v838
      %872 = vst.msk [vmem:[#allocation2 + $0x80] sm:$0xff] %vm855, %v839
      %873 = vst.msk [vmem:[#allocation2 + $0x88] sm:$0xff] %vm855, %v840
      %874 = vst.msk [vmem:[#allocation2 + $0x90] sm:$0xff] %vm855, %v841
      %875 = vst.msk [vmem:[#allocation2 + $0x98] sm:$0xff] %vm855, %v842
      %876 = vst.msk [vmem:[#allocation2 + $0xa0] sm:$0xff] %vm855, %v843
      %877 = vst.msk [vmem:[#allocation2 + $0xa8] sm:$0xff] %vm855, %v844
      %878 = vst.msk [vmem:[#allocation2 + $0xb0] sm:$0xff] %vm855, %v845
      %879 = vst.msk [vmem:[#allocation2 + $0xb8] sm:$0xff] %vm855, %v846
      %880 = vst.msk [vmem:[#allocation2 + $0xc0] sm:$0xff] %vm855, %v847
      %881 = vst.msk [vmem:[#allocation2 + $0xc8] sm:$0xff] %vm855, %v848
      %882 = vst.msk [vmem:[#allocation2 + $0xd0] sm:$0xff] %vm855, %v849
      %883 = vst.msk [vmem:[#allocation2 + $0xd8] sm:$0xff] %vm855, %v850
      %884 = vst.msk [vmem:[#allocation2 + $0xe0] sm:$0xff] %vm855, %v851
      %885 = vst.msk [vmem:[#allocation2 + $0xe8] sm:$0xff] %vm855, %v852
      %886 = vst.msk [vmem:[#allocation2 + $0xf0] sm:$0xff] %vm855, %v853
      %887 = vst.msk [vmem:[#allocation2 + $0xf8] sm:$0xff] %vm855, %v854
      // Predicated region
      $region37: #{tpu_custom_call.1} parent=31 // pred_check
        %p888 = pneg %p268
      $region38: #{tpu_custom_call.1} parent=31 // pred_check_branch
        %890 = sbr.rel (%p888) target = $region40
      $region39: #{tpu_custom_call.1} parent=31 // pred_region
        %v891 = vld [vmem:[#allocation2] sm:$0xff]
        %v892 = vld [vmem:[#allocation2 + $0x8] sm:$0xff]
        %v893 = vld [vmem:[#allocation2 + $0x10] sm:$0xff]
        %v894 = vld [vmem:[#allocation2 + $0x18] sm:$0xff]
        %v895 = vld [vmem:[#allocation2 + $0x20] sm:$0xff]
        %v896 = vld [vmem:[#allocation2 + $0x28] sm:$0xff]
        %v897 = vld [vmem:[#allocation2 + $0x30] sm:$0xff]
        %v898 = vld [vmem:[#allocation2 + $0x38] sm:$0xff]
        %v899 = vld [vmem:[#allocation2 + $0x40] sm:$0xff]
        %v900 = vld [vmem:[#allocation2 + $0x48] sm:$0xff]
        %v901 = vld [vmem:[#allocation2 + $0x50] sm:$0xff]
        %v902 = vld [vmem:[#allocation2 + $0x58] sm:$0xff]
        %v903 = vld [vmem:[#allocation2 + $0x60] sm:$0xff]
        %v904 = vld [vmem:[#allocation2 + $0x68] sm:$0xff]
        %v905 = vld [vmem:[#allocation2 + $0x70] sm:$0xff]
        %v906 = vld [vmem:[#allocation2 + $0x78] sm:$0xff]
        %v907 = vld [vmem:[#allocation2 + $0x80] sm:$0xff]
        %v908 = vld [vmem:[#allocation2 + $0x88] sm:$0xff]
        %v909 = vld [vmem:[#allocation2 + $0x90] sm:$0xff]
        %v910 = vld [vmem:[#allocation2 + $0x98] sm:$0xff]
        %v911 = vld [vmem:[#allocation2 + $0xa0] sm:$0xff]
        %v912 = vld [vmem:[#allocation2 + $0xa8] sm:$0xff]
        %v913 = vld [vmem:[#allocation2 + $0xb0] sm:$0xff]
        %v914 = vld [vmem:[#allocation2 + $0xb8] sm:$0xff]
        %v915 = vld [vmem:[#allocation2 + $0xc0] sm:$0xff]
        %v916 = vld [vmem:[#allocation2 + $0xc8] sm:$0xff]
        %v917 = vld [vmem:[#allocation2 + $0xd0] sm:$0xff]
        %v918 = vld [vmem:[#allocation2 + $0xd8] sm:$0xff]
        %v919 = vld [vmem:[#allocation2 + $0xe0] sm:$0xff]
        %v920 = vld [vmem:[#allocation2 + $0xe8] sm:$0xff]
        %v921 = vld [vmem:[#allocation2 + $0xf0] sm:$0xff]
        %v922 = vld [vmem:[#allocation2 + $0xf8] sm:$0xff]
        %v923 = vld [vmem:[%s257] sm:$0x1]
        %v925 = vperm.slane %v923, 0
        %v927 = vadd.f32 %v891, %v925
        %v928 = vadd.f32 %v892, %v925
        %v929 = vadd.f32 %v893, %v925
        %v930 = vadd.f32 %v894, %v925
        %v931 = vadd.f32 %v895, %v925
        %v932 = vadd.f32 %v896, %v925
        %v933 = vadd.f32 %v897, %v925
        %v934 = vadd.f32 %v898, %v925
        %v935 = vadd.f32 %v899, %v925
        %v936 = vadd.f32 %v900, %v925
        %v937 = vadd.f32 %v901, %v925
        %v938 = vadd.f32 %v902, %v925
        %v939 = vadd.f32 %v903, %v925
        %v940 = vadd.f32 %v904, %v925
        %v941 = vadd.f32 %v905, %v925
        %v942 = vadd.f32 %v906, %v925
        %v943 = vadd.f32 %v907, %v925
        %v944 = vadd.f32 %v908, %v925
        %v945 = vadd.f32 %v909, %v925
        %v946 = vadd.f32 %v910, %v925
        %v947 = vadd.f32 %v911, %v925
        %v948 = vadd.f32 %v912, %v925
        %v949 = vadd.f32 %v913, %v925
        %v950 = vadd.f32 %v914, %v925
        %v951 = vadd.f32 %v915, %v925
        %v952 = vadd.f32 %v916, %v925
        %v953 = vadd.f32 %v917, %v925
        %v954 = vadd.f32 %v918, %v925
        %v955 = vadd.f32 %v919, %v925
        %v956 = vadd.f32 %v920, %v925
        %v957 = vadd.f32 %v921, %v925
        %v958 = vadd.f32 %v922, %v925
        %v959 = vmax.f32 %v927, 0.0
        %v960 = vmax.f32 %v928, 0.0
        %v961 = vmax.f32 %v929, 0.0
        %v962 = vmax.f32 %v930, 0.0
        %v963 = vmax.f32 %v931, 0.0
        %v964 = vmax.f32 %v932, 0.0
        %v965 = vmax.f32 %v933, 0.0
        %v966 = vmax.f32 %v934, 0.0
        %v967 = vmax.f32 %v935, 0.0
        %v968 = vmax.f32 %v936, 0.0
        %v969 = vmax.f32 %v937, 0.0
        %v970 = vmax.f32 %v938, 0.0
        %v971 = vmax.f32 %v939, 0.0
        %v972 = vmax.f32 %v940, 0.0
        %v973 = vmax.f32 %v941, 0.0
        %v974 = vmax.f32 %v942, 0.0
        %v975 = vmax.f32 %v943, 0.0
        %v976 = vmax.f32 %v944, 0.0
        %v977 = vmax.f32 %v945, 0.0
        %v978 = vmax.f32 %v946, 0.0
        %v979 = vmax.f32 %v947, 0.0
        %v980 = vmax.f32 %v948, 0.0
        %v981 = vmax.f32 %v949, 0.0
        %v982 = vmax.f32 %v950, 0.0
        %v983 = vmax.f32 %v951, 0.0
        %v984 = vmax.f32 %v952, 0.0
        %v985 = vmax.f32 %v953, 0.0
        %v986 = vmax.f32 %v954, 0.0
        %v987 = vmax.f32 %v955, 0.0
        %v988 = vmax.f32 %v956, 0.0
        %v989 = vmax.f32 %v957, 0.0
        %v990 = vmax.f32 %v958, 0.0
        %v991 = vpack.c.bf16 %v959, %v959
        %v992 = vpack.c.bf16 %v960, %v960
        %v993 = vpack.c.bf16 %v961, %v961
        %v994 = vpack.c.bf16 %v962, %v962
        %v995 = vpack.c.bf16 %v963, %v963
        %v996 = vpack.c.bf16 %v964, %v964
        %v997 = vpack.c.bf16 %v965, %v965
        %v998 = vpack.c.bf16 %v966, %v966
        %v999 = vpack.c.bf16 %v967, %v967
        %v1000 = vpack.c.bf16 %v968, %v968
        %v1001 = vpack.c.bf16 %v969, %v969
        %v1002 = vpack.c.bf16 %v970, %v970
        %v1003 = vpack.c.bf16 %v971, %v971
        %v1004 = vpack.c.bf16 %v972, %v972
        %v1005 = vpack.c.bf16 %v973, %v973
        %v1006 = vpack.c.bf16 %v974, %v974
        %v1007 = vpack.c.bf16 %v975, %v975
        %v1008 = vpack.c.bf16 %v976, %v976
        %v1009 = vpack.c.bf16 %v977, %v977
        %v1010 = vpack.c.bf16 %v978, %v978
        %v1011 = vpack.c.bf16 %v979, %v979
        %v1012 = vpack.c.bf16 %v980, %v980
        %v1013 = vpack.c.bf16 %v981, %v981
        %v1014 = vpack.c.bf16 %v982, %v982
        %v1015 = vpack.c.bf16 %v983, %v983
        %v1016 = vpack.c.bf16 %v984, %v984
        %v1017 = vpack.c.bf16 %v985, %v985
        %v1018 = vpack.c.bf16 %v986, %v986
        %v1019 = vpack.c.bf16 %v987, %v987
        %v1020 = vpack.c.bf16 %v988, %v988
        %v1021 = vpack.c.bf16 %v989, %v989
        %v1022 = vpack.c.bf16 %v990, %v990
        %vm1023 = vcmask 519168
        %1024 = vst.msk [vmem:[%s265] sm:$0xf] %vm1023, %v991
        %1025 = vst.msk [vmem:[%s265 + $0x4] sm:$0xf] %vm1023, %v992
        %1026 = vst.msk [vmem:[%s265 + $0x8] sm:$0xf] %vm1023, %v993
        %1027 = vst.msk [vmem:[%s265 + $0xc] sm:$0xf] %vm1023, %v994
        %1028 = vst.msk [vmem:[%s265 + $0x10] sm:$0xf] %vm1023, %v995
        %1029 = vst.msk [vmem:[%s265 + $0x14] sm:$0xf] %vm1023, %v996
        %1030 = vst.msk [vmem:[%s265 + $0x18] sm:$0xf] %vm1023, %v997
        %1031 = vst.msk [vmem:[%s265 + $0x1c] sm:$0xf] %vm1023, %v998
        %1032 = vst.msk [vmem:[%s265 + $0x20] sm:$0xf] %vm1023, %v999
        %1033 = vst.msk [vmem:[%s265 + $0x24] sm:$0xf] %vm1023, %v1000
        %1034 = vst.msk [vmem:[%s265 + $0x28] sm:$0xf] %vm1023, %v1001
        %1035 = vst.msk [vmem:[%s265 + $0x2c] sm:$0xf] %vm1023, %v1002
        %1036 = vst.msk [vmem:[%s265 + $0x30] sm:$0xf] %vm1023, %v1003
        %1037 = vst.msk [vmem:[%s265 + $0x34] sm:$0xf] %vm1023, %v1004
        %1038 = vst.msk [vmem:[%s265 + $0x38] sm:$0xf] %vm1023, %v1005
        %1039 = vst.msk [vmem:[%s265 + $0x3c] sm:$0xf] %vm1023, %v1006
        %1040 = vst.msk [vmem:[%s265 + $0x40] sm:$0xf] %vm1023, %v1007
        %1041 = vst.msk [vmem:[%s265 + $0x44] sm:$0xf] %vm1023, %v1008
        %1042 = vst.msk [vmem:[%s265 + $0x48] sm:$0xf] %vm1023, %v1009
        %1043 = vst.msk [vmem:[%s265 + $0x4c] sm:$0xf] %vm1023, %v1010
        %1044 = vst.msk [vmem:[%s265 + $0x50] sm:$0xf] %vm1023, %v1011
        %1045 = vst.msk [vmem:[%s265 + $0x54] sm:$0xf] %vm1023, %v1012
        %1046 = vst.msk [vmem:[%s265 + $0x58] sm:$0xf] %vm1023, %v1013
        %1047 = vst.msk [vmem:[%s265 + $0x5c] sm:$0xf] %vm1023, %v1014
        %1048 = vst.msk [vmem:[%s265 + $0x60] sm:$0xf] %vm1023, %v1015
        %1049 = vst.msk [vmem:[%s265 + $0x64] sm:$0xf] %vm1023, %v1016
        %1050 = vst.msk [vmem:[%s265 + $0x68] sm:$0xf] %vm1023, %v1017
        %1051 = vst.msk [vmem:[%s265 + $0x6c] sm:$0xf] %vm1023, %v1018
        %1052 = vst.msk [vmem:[%s265 + $0x70] sm:$0xf] %vm1023, %v1019
        %1053 = vst.msk [vmem:[%s265 + $0x74] sm:$0xf] %vm1023, %v1020
        %1054 = vst.msk [vmem:[%s265 + $0x78] sm:$0xf] %vm1023, %v1021
        %1055 = vst.msk [vmem:[%s265 + $0x7c] sm:$0xf] %vm1023, %v1022
      $region40: #{tpu_custom_call.1} parent=31 // pred_fallthru
        _
      %s1056 = smul.u32 32, %s19
      %p1057 = scmp.lt.s32.totalorder %s1056, 63
      %s1058 = scalar_select %p1057, %s1056, 63
      %p1059 = scmp.lt.s32.totalorder %s20, 0
      %s1060 = scalar_select %p1059, %s20, 0
      %s1061 = sadd.s32 %s1060, %s1058
      %s1062 = smul.addr %s1061, 4
      %s1063 = scalar_lea.vmem %s3, %s1062
      // Predicated region
      $region41: #{tpu_custom_call.1} parent=31 // pred_check
        %p1064 = pneg %p135
      $region42: #{tpu_custom_call.1} parent=31 // pred_check_branch
        %1066 = sbr.rel (%p1064) target = $region44
      $region43: #{tpu_custom_call.1} parent=31 // pred_region
        %s1067 = smul.u32 32, %s19
      $region44: #{tpu_custom_call.1} parent=31 // pred_fallthru
        _
    $region32: #{tpu_custom_call.1} parent=5 // pred_fallthru
      _
    %p1068 = scmp.le.s32.totalorder 2, %s9
    // Predicated region
    $region45: #{tpu_custom_call.1} parent=5 // pred_check
      %p1069 = pneg %p1068
    $region46: #{tpu_custom_call.1} parent=5 // pred_check_branch
      %1071 = sbr.rel (%p1069) target = $region48
    $region47: #{tpu_custom_call.1} parent=5 // pred_region
      %s1072 = ssub.s32 %s9, 2
      // Predicated region
      $region49: #{tpu_custom_call.1} parent=47 // pred_check
        %p1073 = pneg %p141
      $region50: #{tpu_custom_call.1} parent=47 // pred_check_branch
        %1075 = sbr.rel (%p1073) target = $region52
      $region51: #{tpu_custom_call.1} parent=47 // pred_region
        %s1076 = smul.u32 32, %s22
        %p1077 = scmp.lt.s32.totalorder %s1076, 63
        %s1078 = scalar_select %p1077, %s1076, 63
        %p1079 = scmp.lt.s32.totalorder %s23, 0
        %s1080 = scalar_select %p1079, %s23, 0
        %s1081 = sadd.s32 %s1080, %s1078
        %s1082 = smul.addr %s1081, 4
        %s1083 = scalar_lea.vmem %s3, %s1082
      $region52: #{tpu_custom_call.1} parent=47 // pred_fallthru
        _
    $region48: #{tpu_custom_call.1} parent=5 // pred_fallthru
      _
  $region6: #{tpu_custom_call.1} parent=0 // loop_footer
    %s13 = sadd.s32 1, %s9
  $region7: #{tpu_custom_call.1} parent=0 // loop_footer_branch
    %8 = sbr.rel target = $region3
  $region8: #{tpu_custom_call.1} parent=0 // loop_exit
    _

</llo_original>
